<compile_context>
chip_gen: v7x
topology: tpu7x:2x2x1
jax: 0.10.0
libtpu: 0.0.40
codegen_flags: <defaults>
</compile_context>

<pallas_src>
import numpy as np
import jax
import jax.numpy as jnp
from jax.experimental import pallas as pl
from jax.experimental.pallas import tpu as pltpu

# ---- problem sizes (fixed by the PyTorch module) --------------------------
B = 2                  # demo batch
H = W = 28             # MNIST spatial (980 = 5*14*14 forces 28x28 input)
K = 5                  # conv kernel size
CO = 5                 # conv output channels
OH = OW = 14           # conv output spatial (stride 2, pad 2)
P = OH * OW            # 196
KK = K * K             # 25
FLAT = CO * P          # 980
HID = 100
OUT = 10

# ---- TPU-friendly padded sizes --------------------------------------------
P_PAD = 256            # 196 -> 256  (lane multiple of 128)
KK_PAD = 32            # 25 taps + 1 bias tap -> 32 (sublane multiple of 8)
CO_PAD = 8             # 5 -> 8
FLAT_PAD = CO * P_PAD  # 1280
HID_PAD = 128          # 100 -> 128
OUT_PAD = 128          # 10  -> 128


def mnist_kernel(pt_ref, cw_ref, w1_ref, b1_ref, w2_ref, b2_ref, o_ref,
                 conv_scr, flat_scr):
    # pt_ref : [32, B*256] bf16  im2col patches (+ ones "bias" tap at row 25)
    # cw_ref : [8, 32]     bf16  conv weights (bias folded into column 25)
    # w1_ref : [1280, 128] bf16  FC1 weight, row = c*256+p, col = h (zero-padded)
    # b1_ref : [1, 128]    f32
    # w2_ref : [128, 128]  bf16  FC2 weight transposed (zero-padded)
    # b2_ref : [1, 128]    f32
    # o_ref  : [B, 128]    f32   padded logits
    # conv_scr: [8, B*256] f32 scratch ; flat_scr: [B, 1280] f32 scratch
    bsz = o_ref.shape[0]

    # Conv (+ folded bias) as one bf16 MXU matmul, f32 accumulate, ReLU.
    conv_scr[...] = jnp.maximum(
        jnp.dot(cw_ref[...], pt_ref[...], preferred_element_type=jnp.float32),
        0.0)

    # Flatten into torch .view(B, -1) order: flat[b, c*256 + p] = conv[b, c, p].
    # 256-lane-aligned VMEM copies (B*CO of them) instead of any in-kernel
    # reshape/transpose relayout.
    for b in range(bsz):
        for c in range(CO):
            flat_scr[b:b + 1, c * P_PAD:(c + 1) * P_PAD] = \
                conv_scr[c:c + 1, b * P_PAD:(b + 1) * P_PAD]

    # FC1: single K=1280 contraction, batch is the MXU M dimension.
    h1 = jnp.dot(flat_scr[...].astype(jnp.bfloat16), w1_ref[...],
                 preferred_element_type=jnp.float32)
    h1 = jnp.maximum(h1 + b1_ref[...], 0.0)

    # FC2: lane-dense padded output (unmasked store).
    o_ref[...] = jnp.dot(h1.astype(jnp.bfloat16), w2_ref[...],
                         preferred_element_type=jnp.float32) + b2_ref[...]


def _im2col(x):
    """x: [B, 1, 28, 28] -> patches [B, 25, 196] (k = kh*5+kw, p = oh*14+ow)."""
    bsz = x.shape[0]
    xp = jnp.pad(x, ((0, 0), (0, 0), (2, 2), (2, 2)))            # [B, 1, 32, 32]
    cols = []
    for kh in range(K):
        for kw in range(K):
            patch = xp[:, 0, kh:kh + 2 * OH:2, kw:kw + 2 * OW:2]  # [B, 14, 14]
            cols.append(patch.reshape(bsz, P))
    return jnp.stack(cols, axis=1)                                # [B, 25, 196]


def mnist_deepsecure_forward(x, conv_w, conv_b, w1, b1, w2, b2):
    """x: [B, 1, 28, 28] NCHW float32. Returns logits [B, 10]."""
    bsz = x.shape[0]

    # --- host-side layout prep: pad to lane-dense shapes, cast to bf16 ------
    # Patches [32, B*256]: lanes ordered (b, p); row 25 = ones (bias tap).
    pt = _im2col(x)                                               # [B, 25, 196]
    ptp = jnp.zeros((bsz, KK_PAD, P_PAD), jnp.float32)
    ptp = ptp.at[:, :KK, :P].set(pt)
    ptp = ptp.at[:, KK, :].set(1.0)                               # bias tap
    pt_all = jnp.transpose(ptp, (1, 0, 2)).reshape(KK_PAD, bsz * P_PAD)
    pt_all = pt_all.astype(jnp.bfloat16)

    # Conv weights [8, 32] with the bias folded into tap column 25.
    cw = jnp.zeros((CO_PAD, KK_PAD), jnp.float32)
    cw = cw.at[:CO, :KK].set(conv_w.reshape(CO, KK))
    cw = cw.at[:CO, KK].set(conv_b)
    cw = cw.astype(jnp.bfloat16)

    # FC1 weight [1280, 128]: row index c*256+p matches flat_scr layout;
    # rows with p >= 196, channels >= 5 and cols >= 100 are zero.
    w1_blk = jnp.zeros((CO, P_PAD, HID_PAD), jnp.float32)
    w1_blk = w1_blk.at[:, :P, :HID].set(
        jnp.transpose(w1.reshape(HID, CO, P), (1, 2, 0)))
    w1_pad = w1_blk.reshape(FLAT_PAD, HID_PAD).astype(jnp.bfloat16)
    b1_pad = jnp.zeros((1, HID_PAD), jnp.float32).at[0, :HID].set(b1)

    # FC2 weight [128, 128] (transposed) and bias [1, 128].
    w2_pad = jnp.zeros((HID_PAD, OUT_PAD), jnp.float32).at[:HID, :OUT].set(w2.T)
    w2_pad = w2_pad.astype(jnp.bfloat16)
    b2_pad = jnp.zeros((1, OUT_PAD), jnp.float32).at[0, :OUT].set(b2)

    out = pl.pallas_call(
        mnist_kernel,
        out_shape=jax.ShapeDtypeStruct((bsz, OUT_PAD), jnp.float32),
        grid_spec=pltpu.PrefetchScalarGridSpec(
            num_scalar_prefetch=0,
            grid=(1,),     # whole (tiny) batch in one step
            in_specs=[
                pl.BlockSpec((KK_PAD, bsz * P_PAD), lambda i: (0, 0)),  # patches
                pl.BlockSpec((CO_PAD, KK_PAD), lambda i: (0, 0)),       # conv W
                pl.BlockSpec((FLAT_PAD, HID_PAD), lambda i: (0, 0)),    # fc1 W
                pl.BlockSpec((1, HID_PAD), lambda i: (0, 0)),           # fc1 b
                pl.BlockSpec((HID_PAD, OUT_PAD), lambda i: (0, 0)),     # fc2 W
                pl.BlockSpec((1, OUT_PAD), lambda i: (0, 0)),           # fc2 b
            ],
            out_specs=pl.BlockSpec((bsz, OUT_PAD), lambda i: (0, 0)),
            scratch_shapes=[
                pltpu.VMEM((CO_PAD, bsz * P_PAD), jnp.float32),  # conv output
                pltpu.VMEM((bsz, FLAT_PAD), jnp.float32),        # flattened
            ]),
        compiler_params=pltpu.CompilerParams(
            dimension_semantics=("arbitrary",)),
    )(pt_all, cw, w1_pad, b1_pad, w2_pad, b2_pad)
    return out[:, :OUT]


def reference_forward(x, conv_w, conv_b, w1, b1, w2, b2):
    conv = jax.lax.conv_general_dilated(
        x, conv_w, window_strides=(2, 2), padding=((2, 2), (2, 2)),
        dimension_numbers=("NCHW", "OIHW", "NCHW"))
    conv = jnp.maximum(conv + conv_b.reshape(1, CO, 1, 1), 0.0)
    flat = conv.reshape(x.shape[0], -1)                           # torch .view(B, -1)
    h1 = jnp.maximum(flat @ w1.T + b1, 0.0)
    return h1 @ w2.T + b2


if __name__ == "__main__":
    key = jax.random.PRNGKey(0)
    kx, kcw, kcb, k1w, k1b, k2w, k2b = jax.random.split(key, 7)

    # Deterministic synthetic parameters (shapes from the PyTorch __init__).
    x = jax.random.normal(kx, (B, 1, H, W), dtype=jnp.float32)
    conv_w = 0.10 * jax.random.normal(kcw, (CO, 1, K, K), dtype=jnp.float32)
    conv_b = 0.10 * jax.random.normal(kcb, (CO,), dtype=jnp.float32)
    w1 = 0.05 * jax.random.normal(k1w, (HID, FLAT), dtype=jnp.float32)
    b1 = 0.05 * jax.random.normal(k1b, (HID,), dtype=jnp.float32)
    w2 = 0.05 * jax.random.normal(k2w, (OUT, HID), dtype=jnp.float32)
    b2 = 0.05 * jax.random.normal(k2b, (OUT,), dtype=jnp.float32)

    out = mnist_deepsecure_forward(x, conv_w, conv_b, w1, b1, w2, b2)
    out = jax.block_until_ready(out)

    ref = reference_forward(x, conv_w, conv_b, w1, b1, w2, b2)
    np.testing.assert_allclose(np.asarray(out), np.asarray(ref),
                               rtol=2e-2, atol=2e-2)
    print("KERNEL_OK")
</pallas_src>

<mosaic_0001>
module attributes {stable_mosaic.version = 11 : i64} {
  func.func @mnist_kernel(%arg0: i32, %arg1: memref<32x512xbf16, #tpu.memory_space<vmem>>, %arg2: memref<8x32xbf16, #tpu.memory_space<vmem>>, %arg3: memref<1280x128xbf16, #tpu.memory_space<vmem>>, %arg4: memref<1x128xf32, #tpu.memory_space<vmem>>, %arg5: memref<128x128xbf16, #tpu.memory_space<vmem>>, %arg6: memref<1x128xf32, #tpu.memory_space<vmem>>, %arg7: memref<2x128xf32, #tpu.memory_space<vmem>>, %arg8: memref<8x512xf32, #tpu.memory_space<vmem>>, %arg9: memref<2x1280xf32, #tpu.memory_space<vmem>>) attributes {dimension_semantics = [#tpu.dimension_semantics<arbitrary>], iteration_bounds = array<i64: 1>, scalar_prefetch = 0 : i64, scratch_operands = 2 : i64, tpu.core_type = #tpu.core_type<tc>, window_params = [{pipeline_mode = #tpu.pipeline_mode<synchronous>, transform_indices = @transform_0, window_bounds = array<i64: 32, 512>}, {pipeline_mode = #tpu.pipeline_mode<synchronous>, transform_indices = @transform_1, window_bounds = array<i64: 8, 32>}, {pipeline_mode = #tpu.pipeline_mode<synchronous>, transform_indices = @transform_2, window_bounds = array<i64: 1280, 128>}, {pipeline_mode = #tpu.pipeline_mode<synchronous>, transform_indices = @transform_3, window_bounds = array<i64: 1, 128>}, {pipeline_mode = #tpu.pipeline_mode<synchronous>, transform_indices = @transform_4, window_bounds = array<i64: 128, 128>}, {pipeline_mode = #tpu.pipeline_mode<synchronous>, transform_indices = @transform_5, window_bounds = array<i64: 1, 128>}, {pipeline_mode = #tpu.pipeline_mode<synchronous>, transform_indices = @transform_6, window_bounds = array<i64: 2, 128>}]} {
    %c0 = arith.constant 0 : index
    %c0_0 = arith.constant 0 : index
    %0 = vector.load %arg2[%c0, %c0_0] : memref<8x32xbf16, #tpu.memory_space<vmem>>, vector<8x32xbf16>
    %c0_1 = arith.constant 0 : index
    %c0_2 = arith.constant 0 : index
    %1 = vector.load %arg1[%c0_1, %c0_2] : memref<32x512xbf16, #tpu.memory_space<vmem>>, vector<32x512xbf16>
    %cst = arith.constant dense<0.000000e+00> : vector<8x512xf32>
    %2 = tpu.matmul %0, %1, %cst {dimension_numbers = #tpu.dot_dimension_numbers<[1], [0], [0], [1], [0, 0, 1, 1], [], []>} : vector<8x32xbf16>, vector<32x512xbf16>, vector<8x512xf32> -> vector<8x512xf32>
    %cst_3 = arith.constant 0.000000e+00 : f32
    %3 = vector.broadcast %cst_3 : f32 to vector<8x512xf32>
    %4 = arith.maximumf %2, %3 : vector<8x512xf32>
    %c0_4 = arith.constant 0 : index
    %c0_5 = arith.constant 0 : index
    %5 = vector.load %arg8[%c0_4, %c0_5] : memref<8x512xf32, #tpu.memory_space<vmem>>, vector<8x512xf32>
    tpu.vector_store %arg8[%c0_4, %c0_5], %4 {strides = array<i32>} : memref<8x512xf32, #tpu.memory_space<vmem>>, vector<8x512xf32>,
    %c0_6 = arith.constant 0 : index
    %c0_7 = arith.constant 0 : index
    %6 = vector.load %arg8[%c0_6, %c0_7] : memref<8x512xf32, #tpu.memory_space<vmem>>, vector<1x256xf32>
    %c0_8 = arith.constant 0 : index
    %c0_9 = arith.constant 0 : index
    %7 = vector.load %arg9[%c0_8, %c0_9] : memref<2x1280xf32, #tpu.memory_space<vmem>>, vector<1x256xf32>
    tpu.vector_store %arg9[%c0_8, %c0_9], %6 {strides = array<i32>} : memref<2x1280xf32, #tpu.memory_space<vmem>>, vector<1x256xf32>,
    %c1 = arith.constant 1 : index
    %c0_10 = arith.constant 0 : index
    %8 = vector.load %arg8[%c1, %c0_10] : memref<8x512xf32, #tpu.memory_space<vmem>>, vector<1x256xf32>
    %c0_11 = arith.constant 0 : index
    %c256 = arith.constant 256 : index
    %9 = vector.load %arg9[%c0_11, %c256] : memref<2x1280xf32, #tpu.memory_space<vmem>>, vector<1x256xf32>
    tpu.vector_store %arg9[%c0_11, %c256], %8 {strides = array<i32>} : memref<2x1280xf32, #tpu.memory_space<vmem>>, vector<1x256xf32>,
    %c2 = arith.constant 2 : index
    %c0_12 = arith.constant 0 : index
    %10 = vector.load %arg8[%c2, %c0_12] : memref<8x512xf32, #tpu.memory_space<vmem>>, vector<1x256xf32>
    %c0_13 = arith.constant 0 : index
    %c512 = arith.constant 512 : index
    %11 = vector.load %arg9[%c0_13, %c512] : memref<2x1280xf32, #tpu.memory_space<vmem>>, vector<1x256xf32>
    tpu.vector_store %arg9[%c0_13, %c512], %10 {strides = array<i32>} : memref<2x1280xf32, #tpu.memory_space<vmem>>, vector<1x256xf32>,
    %c3 = arith.constant 3 : index
    %c0_14 = arith.constant 0 : index
    %12 = vector.load %arg8[%c3, %c0_14] : memref<8x512xf32, #tpu.memory_space<vmem>>, vector<1x256xf32>
    %c0_15 = arith.constant 0 : index
    %c768 = arith.constant 768 : index
    %13 = vector.load %arg9[%c0_15, %c768] : memref<2x1280xf32, #tpu.memory_space<vmem>>, vector<1x256xf32>
    tpu.vector_store %arg9[%c0_15, %c768], %12 {strides = array<i32>} : memref<2x1280xf32, #tpu.memory_space<vmem>>, vector<1x256xf32>,
    %c4 = arith.constant 4 : index
    %c0_16 = arith.constant 0 : index
    %14 = vector.load %arg8[%c4, %c0_16] : memref<8x512xf32, #tpu.memory_space<vmem>>, vector<1x256xf32>
    %c0_17 = arith.constant 0 : index
    %c1024 = arith.constant 1024 : index
    %15 = vector.load %arg9[%c0_17, %c1024] : memref<2x1280xf32, #tpu.memory_space<vmem>>, vector<1x256xf32>
    tpu.vector_store %arg9[%c0_17, %c1024], %14 {strides = array<i32>} : memref<2x1280xf32, #tpu.memory_space<vmem>>, vector<1x256xf32>,
    %c0_18 = arith.constant 0 : index
    %c256_19 = arith.constant 256 : index
    %16 = vector.load %arg8[%c0_18, %c256_19] : memref<8x512xf32, #tpu.memory_space<vmem>>, vector<1x256xf32>
    %c1_20 = arith.constant 1 : index
    %c0_21 = arith.constant 0 : index
    %17 = vector.load %arg9[%c1_20, %c0_21] : memref<2x1280xf32, #tpu.memory_space<vmem>>, vector<1x256xf32>
    tpu.vector_store %arg9[%c1_20, %c0_21], %16 {strides = array<i32>} : memref<2x1280xf32, #tpu.memory_space<vmem>>, vector<1x256xf32>,
    %c1_22 = arith.constant 1 : index
    %c256_23 = arith.constant 256 : index
    %18 = vector.load %arg8[%c1_22, %c256_23] : memref<8x512xf32, #tpu.memory_space<vmem>>, vector<1x256xf32>
    %c1_24 = arith.constant 1 : index
    %c256_25 = arith.constant 256 : index
    %19 = vector.load %arg9[%c1_24, %c256_25] : memref<2x1280xf32, #tpu.memory_space<vmem>>, vector<1x256xf32>
    tpu.vector_store %arg9[%c1_24, %c256_25], %18 {strides = array<i32>} : memref<2x1280xf32, #tpu.memory_space<vmem>>, vector<1x256xf32>,
    %c2_26 = arith.constant 2 : index
    %c256_27 = arith.constant 256 : index
    %20 = vector.load %arg8[%c2_26, %c256_27] : memref<8x512xf32, #tpu.memory_space<vmem>>, vector<1x256xf32>
    %c1_28 = arith.constant 1 : index
    %c512_29 = arith.constant 512 : index
    %21 = vector.load %arg9[%c1_28, %c512_29] : memref<2x1280xf32, #tpu.memory_space<vmem>>, vector<1x256xf32>
    tpu.vector_store %arg9[%c1_28, %c512_29], %20 {strides = array<i32>} : memref<2x1280xf32, #tpu.memory_space<vmem>>, vector<1x256xf32>,
    %c3_30 = arith.constant 3 : index
    %c256_31 = arith.constant 256 : index
    %22 = vector.load %arg8[%c3_30, %c256_31] : memref<8x512xf32, #tpu.memory_space<vmem>>, vector<1x256xf32>
    %c1_32 = arith.constant 1 : index
    %c768_33 = arith.constant 768 : index
    %23 = vector.load %arg9[%c1_32, %c768_33] : memref<2x1280xf32, #tpu.memory_space<vmem>>, vector<1x256xf32>
    tpu.vector_store %arg9[%c1_32, %c768_33], %22 {strides = array<i32>} : memref<2x1280xf32, #tpu.memory_space<vmem>>, vector<1x256xf32>,
    %c4_34 = arith.constant 4 : index
    %c256_35 = arith.constant 256 : index
    %24 = vector.load %arg8[%c4_34, %c256_35] : memref<8x512xf32, #tpu.memory_space<vmem>>, vector<1x256xf32>
    %c1_36 = arith.constant 1 : index
    %c1024_37 = arith.constant 1024 : index
    %25 = vector.load %arg9[%c1_36, %c1024_37] : memref<2x1280xf32, #tpu.memory_space<vmem>>, vector<1x256xf32>
    tpu.vector_store %arg9[%c1_36, %c1024_37], %24 {strides = array<i32>} : memref<2x1280xf32, #tpu.memory_space<vmem>>, vector<1x256xf32>,
    %c0_38 = arith.constant 0 : index
    %c0_39 = arith.constant 0 : index
    %26 = vector.load %arg9[%c0_38, %c0_39] : memref<2x1280xf32, #tpu.memory_space<vmem>>, vector<2x1280xf32>
    %27 = arith.truncf %26 : vector<2x1280xf32> to vector<2x1280xbf16>
    %c0_40 = arith.constant 0 : index
    %c0_41 = arith.constant 0 : index
    %28 = vector.load %arg3[%c0_40, %c0_41] : memref<1280x128xbf16, #tpu.memory_space<vmem>>, vector<1280x128xbf16>
    %cst_42 = arith.constant dense<0.000000e+00> : vector<2x128xf32>
    %29 = tpu.matmul %27, %28, %cst_42 {dimension_numbers = #tpu.dot_dimension_numbers<[1], [0], [0], [1], [0, 0, 1, 1], [], []>} : vector<2x1280xbf16>, vector<1280x128xbf16>, vector<2x128xf32> -> vector<2x128xf32>
    %c0_43 = arith.constant 0 : index
    %c0_44 = arith.constant 0 : index
    %30 = vector.load %arg4[%c0_43, %c0_44] : memref<1x128xf32, #tpu.memory_space<vmem>>, vector<1x128xf32>
    %31 = vector.broadcast %30 : vector<1x128xf32> to vector<2x128xf32>
    %32 = arith.addf %29, %31 : vector<2x128xf32>
    %cst_45 = arith.constant 0.000000e+00 : f32
    %33 = vector.broadcast %cst_45 : f32 to vector<2x128xf32>
    %34 = arith.maximumf %32, %33 : vector<2x128xf32>
    %35 = arith.truncf %34 : vector<2x128xf32> to vector<2x128xbf16>
    %c0_46 = arith.constant 0 : index
    %c0_47 = arith.constant 0 : index
    %36 = vector.load %arg5[%c0_46, %c0_47] : memref<128x128xbf16, #tpu.memory_space<vmem>>, vector<128x128xbf16>
    %cst_48 = arith.constant dense<0.000000e+00> : vector<2x128xf32>
    %37 = tpu.matmul %35, %36, %cst_48 {dimension_numbers = #tpu.dot_dimension_numbers<[1], [0], [0], [1], [0, 0, 1, 1], [], []>} : vector<2x128xbf16>, vector<128x128xbf16>, vector<2x128xf32> -> vector<2x128xf32>
    %c0_49 = arith.constant 0 : index
    %c0_50 = arith.constant 0 : index
    %38 = vector.load %arg6[%c0_49, %c0_50] : memref<1x128xf32, #tpu.memory_space<vmem>>, vector<1x128xf32>
    %39 = vector.broadcast %38 : vector<1x128xf32> to vector<2x128xf32>
    %40 = arith.addf %37, %39 : vector<2x128xf32>
    %c0_51 = arith.constant 0 : index
    %c0_52 = arith.constant 0 : index
    %41 = vector.load %arg7[%c0_51, %c0_52] : memref<2x128xf32, #tpu.memory_space<vmem>>, vector<2x128xf32>
    tpu.vector_store %arg7[%c0_51, %c0_52], %40 {strides = array<i32>} : memref<2x128xf32, #tpu.memory_space<vmem>>, vector<2x128xf32>,
    return
  }
  func.func @transform_0(%arg0: i32) -> (i32, i32) {
    %c0_i32 = arith.constant 0 : i32
    %c0_i32_0 = arith.constant 0 : i32
    %c0_i32_1 = arith.constant 0 : i32
    return %c0_i32, %c0_i32_0 : i32, i32
  }
  func.func @transform_1(%arg0: i32) -> (i32, i32) {
    %c0_i32 = arith.constant 0 : i32
    %c0_i32_0 = arith.constant 0 : i32
    %c0_i32_1 = arith.constant 0 : i32
    return %c0_i32, %c0_i32_0 : i32, i32
  }
  func.func @transform_2(%arg0: i32) -> (i32, i32) {
    %c0_i32 = arith.constant 0 : i32
    %c0_i32_0 = arith.constant 0 : i32
    %c0_i32_1 = arith.constant 0 : i32
    return %c0_i32, %c0_i32_0 : i32, i32
  }
  func.func @transform_3(%arg0: i32) -> (i32, i32) {
    %c0_i32 = arith.constant 0 : i32
    %c0_i32_0 = arith.constant 0 : i32
    %c0_i32_1 = arith.constant 0 : i32
    return %c0_i32, %c0_i32_0 : i32, i32
  }
  func.func @transform_4(%arg0: i32) -> (i32, i32) {
    %c0_i32 = arith.constant 0 : i32
    %c0_i32_0 = arith.constant 0 : i32
    %c0_i32_1 = arith.constant 0 : i32
    return %c0_i32, %c0_i32_0 : i32, i32
  }
  func.func @transform_5(%arg0: i32) -> (i32, i32) {
    %c0_i32 = arith.constant 0 : i32
    %c0_i32_0 = arith.constant 0 : i32
    %c0_i32_1 = arith.constant 0 : i32
    return %c0_i32, %c0_i32_0 : i32, i32
  }
  func.func @transform_6(%arg0: i32) -> (i32, i32) {
    %c0_i32 = arith.constant 0 : i32
    %c0_i32_0 = arith.constant 0 : i32
    %c0_i32_1 = arith.constant 0 : i32
    return %c0_i32, %c0_i32_0 : i32, i32
  }
}

</mosaic_0001>

<llo_original>
// kernel: tpu_custom_call.1
$region0: #{tpu_custom_call.1}
  #allocation0 [shape = 'u32[]', space=smem, size = 0x4, offset = 0x4, fixed_abs, tag = 'smem constant byte address 0x4 - core index']
  #allocation1 [shape = 'u32[144,128]{1,0:T(1,128)}', space=vmem, size = 0x12000, scoped, tag = 'internal scratch']
  #allocation2 [shape = 'f32[8,512]{1,0:T(8,128)}', space=vmem, size = 0x4000, scoped, tag = 'scratch operand']
  #allocation3 [shape = 'f32[2,1280]{1,0:T(2,128)}', space=vmem, size = 0x2800, scoped, tag = 'scratch operand']
  %s0 = inlined_call_operand.hbm [shape: bf16[32,512], index: 0, kind: input, shape index: {}]
  %s1 = inlined_call_operand.hbm [shape: bf16[8,32], index: 1, kind: input, shape index: {}]
  %s2 = inlined_call_operand.hbm [shape: bf16[1280,128], index: 2, kind: input, shape index: {}]
  %s3 = inlined_call_operand.vmem [shape: f32[1,128], index: 3, kind: input, shape index: {}]
  %s4 = inlined_call_operand.hbm [shape: bf16[128,128], index: 4, kind: input, shape index: {}]
  %s5 = inlined_call_operand.vmem [shape: f32[1,128], index: 5, kind: input, shape index: {}]
  %s6 = inlined_call_operand.hbm [shape: f32[2,128], index: 6, kind: output, shape index: {}]
  %s7 = sld [smem:[#allocation0]]
  $region50: #{tpu_custom_call.1} parent=0
    _
  %s9 = ssub.s32 1, %s7
  %s10 = scalar_select 0, %s9, %s7
  $region1: #{tpu_custom_call.1} parent=0
    #allocation4 [shape = 'u8[32768]{0}', space=vmem, size = 0x8000, scoped, tag = 'input window, operand 0, single buffered']
    #allocation5 [shape = 's32[1]{0}', space=sflag, size = 0x4, scoped, tag = 'scoped memory for tpu_custom_call.1']
    #allocation6 [shape = 's32[1]{0}', space=sflag, size = 0x4, scoped, tag = 'scoped memory for tpu_custom_call.1']
    #allocation7 [shape = 'u8[2048]{0}', space=vmem, size = 0x800, scoped, tag = 'input window, operand 1, single buffered']
    #allocation8 [shape = 's32[1]{0}', space=sflag, size = 0x4, scoped, tag = 'scoped memory for tpu_custom_call.1']
    #allocation9 [shape = 'u8[327680]{0}', space=vmem, size = 0x50000, scoped, tag = 'input window, operand 2, single buffered']
    #allocation10 [shape = 'u8[32768]{0}', space=vmem, size = 0x8000, scoped, tag = 'input window, operand 4, single buffered']
    #allocation11 [shape = 's32[1]{0}', space=sflag, size = 0x4, scoped, tag = 'scoped memory for tpu_custom_call.1']
    #allocation12 [shape = 'u8[1024]{0}', space=vmem, size = 0x400, scoped, tag = 'output window, operand 0, single buffered']
    %11 = vsyncpa [#allocation5], 0
    %12 = vsyncpa [#allocation8], 0
    %13 = vsyncpa [#allocation11], 0
    %14 = vsyncpa [#allocation6], 0
    // Predicated region
    $region2: #{tpu_custom_call.1} parent=1 // pred_check
      _
    $region3: #{tpu_custom_call.1} parent=1 // pred_check_branch
      %16 = sbr.rel (0) target = $region5
    $region4: #{tpu_custom_call.1} parent=1 // pred_region
      %s18 = ssub.s32 1024, 1024
      %19 = vsyncadd [#allocation5], %s18
      %s20 = sshll.u32 [#allocation4], 4
      %s21 = int_to_ptr.vmem [resolvable:$true] %s20
      %26 = dma.hbm_to_vmem [thread:$0]  %s0, 1024, %s21, [#allocation5], 256, 256, 16
    $region5: #{tpu_custom_call.1} parent=1 // pred_fallthru
      _
    // Predicated region
    $region6: #{tpu_custom_call.1} parent=1 // pred_check
      _
    $region7: #{tpu_custom_call.1} parent=1 // pred_check_branch
      %28 = sbr.rel (0) target = $region9
    $region8: #{tpu_custom_call.1} parent=1 // pred_region
      %s30 = ssub.s32 64, 64
      %31 = vsyncadd [#allocation8], %s30
      %s33 = sshll.u32 [#allocation7], 4
      %s34 = int_to_ptr.vmem [resolvable:$true] %s33
      %36 = dma.hbm_to_vmem [thread:$0]  %s1, 64, %s34, [#allocation8]
    $region9: #{tpu_custom_call.1} parent=1 // pred_fallthru
      _
    // Predicated region
    $region10: #{tpu_custom_call.1} parent=1 // pred_check
      _
    $region11: #{tpu_custom_call.1} parent=1 // pred_check_branch
      %38 = sbr.rel (0) target = $region13
    $region12: #{tpu_custom_call.1} parent=1 // pred_region
      %s40 = ssub.s32 10240, 10240
      %41 = vsyncadd [#allocation8], %s40
      %s42 = sshll.u32 [#allocation9], 4
      %s43 = int_to_ptr.vmem [resolvable:$true] %s42
      %48 = dma.hbm_to_vmem [thread:$0]  %s2, 10240, %s43, [#allocation8], 64, 64, 4
    $region13: #{tpu_custom_call.1} parent=1 // pred_fallthru
      _
    // Predicated region
    $region14: #{tpu_custom_call.1} parent=1 // pred_check
      _
    $region15: #{tpu_custom_call.1} parent=1 // pred_check_branch
      %50 = sbr.rel (0) target = $region17
    $region16: #{tpu_custom_call.1} parent=1 // pred_region
      _
    $region17: #{tpu_custom_call.1} parent=1 // pred_fallthru
      _
    // Predicated region
    $region18: #{tpu_custom_call.1} parent=1 // pred_check
      _
    $region19: #{tpu_custom_call.1} parent=1 // pred_check_branch
      %52 = sbr.rel (0) target = $region21
    $region20: #{tpu_custom_call.1} parent=1 // pred_region
      %s54 = ssub.s32 1024, 1024
      %55 = vsyncadd [#allocation11], %s54
      %s56 = sshll.u32 [#allocation10], 4
      %s57 = int_to_ptr.vmem [resolvable:$true] %s56
      %62 = dma.hbm_to_vmem [thread:$0]  %s4, 1024, %s57, [#allocation11], 64, 64, 4
    $region21: #{tpu_custom_call.1} parent=1 // pred_fallthru
      _
    // Predicated region
    $region22: #{tpu_custom_call.1} parent=1 // pred_check
      _
    $region23: #{tpu_custom_call.1} parent=1 // pred_check_branch
      %64 = sbr.rel (0) target = $region25
    $region24: #{tpu_custom_call.1} parent=1 // pred_region
      _
    $region25: #{tpu_custom_call.1} parent=1 // pred_fallthru
      _
    // Predicated region
    $region26: #{tpu_custom_call.1} parent=1 // pred_check
      _
    $region27: #{tpu_custom_call.1} parent=1 // pred_check_branch
      %66 = sbr.rel (0) target = $region29
    $region28: #{tpu_custom_call.1} parent=1 // pred_region
      %67 = dma.done [#allocation5], 1024
    $region29: #{tpu_custom_call.1} parent=1 // pred_fallthru
      _
    // Predicated region
    $region30: #{tpu_custom_call.1} parent=1 // pred_check
      _
    $region31: #{tpu_custom_call.1} parent=1 // pred_check_branch
      %69 = sbr.rel (0) target = $region33
    $region32: #{tpu_custom_call.1} parent=1 // pred_region
      %70 = dma.done [#allocation8], 64
    $region33: #{tpu_custom_call.1} parent=1 // pred_fallthru
      _
    // Predicated region
    $region34: #{tpu_custom_call.1} parent=1 // pred_check
      _
    $region35: #{tpu_custom_call.1} parent=1 // pred_check_branch
      %72 = sbr.rel (0) target = $region37
    $region36: #{tpu_custom_call.1} parent=1 // pred_region
      %73 = dma.done [#allocation8], 10240
    $region37: #{tpu_custom_call.1} parent=1 // pred_fallthru
      _
    // Predicated region
    $region38: #{tpu_custom_call.1} parent=1 // pred_check
      _
    $region39: #{tpu_custom_call.1} parent=1 // pred_check_branch
      %75 = sbr.rel (0) target = $region41
    $region40: #{tpu_custom_call.1} parent=1 // pred_region
      %76 = dma.done [#allocation11], 1024
    $region41: #{tpu_custom_call.1} parent=1 // pred_fallthru
      _
    %v78 = vld [vmem:[#allocation7] sm:$0xf]
    %v79 = vld [vmem:[#allocation4] sm:$0xff]
    %v80 = vld [vmem:[#allocation4 + $0x8] sm:$0xff]
    %v81 = vld [vmem:[#allocation4 + $0x10] sm:$0xff]
    %v82 = vld [vmem:[#allocation4 + $0x18] sm:$0xff]
    %v83 = vld [vmem:[#allocation4 + $0x20] sm:$0xff]
    %v84 = vld [vmem:[#allocation4 + $0x28] sm:$0xff]
    %v85 = vld [vmem:[#allocation4 + $0x30] sm:$0xff]
    %v86 = vld [vmem:[#allocation4 + $0x38] sm:$0xff]
    %v95 = vunpack.c.l.b16 %v79
    %v96 = vunpack.c.h.b16 %v79
    %v97 = vunpack.c.l.b16 %v80
    %v98 = vunpack.c.h.b16 %v80
    %v99 = vunpack.c.l.b16 %v81
    %v100 = vunpack.c.h.b16 %v81
    %v101 = vunpack.c.l.b16 %v82
    %v102 = vunpack.c.h.b16 %v82
    %v103 = vunpack.c.l.b16 %v83
    %v104 = vunpack.c.h.b16 %v83
    %v105 = vunpack.c.l.b16 %v84
    %v106 = vunpack.c.h.b16 %v84
    %v107 = vunpack.c.l.b16 %v85
    %v108 = vunpack.c.h.b16 %v85
    %v109 = vunpack.c.l.b16 %v86
    %v110 = vunpack.c.h.b16 %v86
    %v111 = vpack.c.b16 %v99, %v95
    %v112 = vpack.c.b16 %v100, %v96
    %v113 = vpack.c.b16 %v101, %v97
    %v114 = vpack.c.b16 %v102, %v98
    %v115 = vpack.c.b16 %v107, %v103
    %v116 = vpack.c.b16 %v108, %v104
    %v117 = vpack.c.b16 %v109, %v105
    %v118 = vpack.c.b16 %v110, %v106
    %vm127 = vcmask 261120
    %v129 = vsel %vm127, %v78, 0
    %131 = vmatprep.subr.bf16.mxu0 %v112
    %132 = vmatpush1.bf16.msra.mxu0 %v111
    %133 = vmatprep.subr.bf16.mxu0 %v116
    %134 = vmatpush1.bf16.msra.mxu0 %v115
    %135 = vmatprep.subr.bf16.mxu0 0
    %136 = vmatpush1.bf16.msra.mxu0 0
    %137 = vmatprep.subr.bf16.mxu0 0
    %138 = vmatpush1.bf16.msra.mxu0 0
    %139 = vmatprep.subr.bf16.mxu0 0
    %140 = vmatpush1.bf16.msra.mxu0 0
    %141 = vmatprep.subr.bf16.mxu0 0
    %142 = vmatpush1.bf16.msra.mxu0 0
    %143 = vmatprep.subr.bf16.mxu0 0
    %144 = vmatpush1.bf16.msra.mxu0 0
    %145 = vmatprep.subr.bf16.mxu0 0
    %146 = vmatpush1.bf16.msra.mxu0 0
    %147 = vmatprep.subr.bf16.mxu0 0
    %148 = vmatpush1.bf16.msra.mxu0 0
    %149 = vmatprep.subr.bf16.mxu0 0
    %150 = vmatpush1.bf16.msra.mxu0 0
    %151 = vmatprep.subr.bf16.mxu0 0
    %152 = vmatpush1.bf16.msra.mxu0 0
    %153 = vmatprep.subr.bf16.mxu0 0
    %154 = vmatpush1.bf16.msra.mxu0 0
    %155 = vmatprep.subr.bf16.mxu0 0
    %156 = vmatpush1.bf16.msra.mxu0 0
    %157 = vmatprep.subr.bf16.mxu0 0
    %158 = vmatpush1.bf16.msra.mxu0 0
    %159 = vmatprep.subr.bf16.mxu0 0
    %160 = vmatpush1.bf16.msra.mxu0 0
    %161 = vmatprep.subr.bf16.mxu0 0
    %162 = vmatpush1.bf16.msra.mxu0 0
    %163 = vmatprep.mubr.bf16.mxu0 0
    %164 = vmatmul.mubr.bf16.gmra.mrb[0].mxu0 %v129
    %v165 = vpop.f32.mrb[0].mxu0
    %v166 = vadd.f32 0.0, %v165
    %v167 = vpop.f32.mrb[0].mxu0
    %v168 = vadd.f32 0.0, %v167
    %v169 = vpop.f32.mrb[0].mxu0
    %v170 = vpop.f32.mrb[0].mxu0
    %171 = vdwg.mxu0
    %172 = vmatprep.subr.bf16.mxu0 %v114
    %173 = vmatpush1.bf16.msra.mxu0 %v113
    %174 = vmatprep.subr.bf16.mxu0 %v118
    %175 = vmatpush1.bf16.msra.mxu0 %v117
    %176 = vmatprep.subr.bf16.mxu0 0
    %177 = vmatpush1.bf16.msra.mxu0 0
    %178 = vmatprep.subr.bf16.mxu0 0
    %179 = vmatpush1.bf16.msra.mxu0 0
    %180 = vmatprep.subr.bf16.mxu0 0
    %181 = vmatpush1.bf16.msra.mxu0 0
    %182 = vmatprep.subr.bf16.mxu0 0
    %183 = vmatpush1.bf16.msra.mxu0 0
    %184 = vmatprep.subr.bf16.mxu0 0
    %185 = vmatpush1.bf16.msra.mxu0 0
    %186 = vmatprep.subr.bf16.mxu0 0
    %187 = vmatpush1.bf16.msra.mxu0 0
    %188 = vmatprep.subr.bf16.mxu0 0
    %189 = vmatpush1.bf16.msra.mxu0 0
    %190 = vmatprep.subr.bf16.mxu0 0
    %191 = vmatpush1.bf16.msra.mxu0 0
    %192 = vmatprep.subr.bf16.mxu0 0
    %193 = vmatpush1.bf16.msra.mxu0 0
    %194 = vmatprep.subr.bf16.mxu0 0
    %195 = vmatpush1.bf16.msra.mxu0 0
    %196 = vmatprep.subr.bf16.mxu0 0
    %197 = vmatpush1.bf16.msra.mxu0 0
    %198 = vmatprep.subr.bf16.mxu0 0
    %199 = vmatpush1.bf16.msra.mxu0 0
    %200 = vmatprep.subr.bf16.mxu0 0
    %201 = vmatpush1.bf16.msra.mxu0 0
    %202 = vmatprep.subr.bf16.mxu0 0
    %203 = vmatpush1.bf16.msra.mxu0 0
    %204 = vmatprep.mubr.bf16.mxu0 0
    %205 = vmatmul.mubr.bf16.gmra.mrb[0].mxu0 %v129
    %v206 = vpop.f32.mrb[0].mxu0
    %v207 = vadd.f32 0.0, %v206
    %v208 = vpop.f32.mrb[0].mxu0
    %v209 = vadd.f32 0.0, %v208
    %v210 = vpop.f32.mrb[0].mxu0
    %v211 = vpop.f32.mrb[0].mxu0
    %212 = vdwg.mxu0
    %v213 = vmax.f32 %v166, 0.0
    %v214 = vmax.f32 %v168, 0.0
    %v215 = vmax.f32 %v207, 0.0
    %v216 = vmax.f32 %v209, 0.0
    %217 = vst [vmem:[#allocation2] sm:$0xff] %v213
    %218 = vst [vmem:[#allocation2 + $0x8] sm:$0xff] %v214
    %219 = vst [vmem:[#allocation2 + $0x10] sm:$0xff] %v215
    %220 = vst [vmem:[#allocation2 + $0x18] sm:$0xff] %v216
    %v221 = vld [vmem:[#allocation2] ss:$8 sm:$0x3]
    %v222 = vlaneseq
    %vm223 = vcmp.ge.s32.totalorder %v222, 0
    %vm224 = vcmp.lt.s32.totalorder %v222, 256
    %vm225 = vmand %vm223, %vm224
    %226 = vst.msk [vmem:[#allocation3] ss:$2 sm:$0x3] %vm225, %v221
    %s227 = scalar_lea.vmem [#allocation2], 1
    %v228 = vld [vmem:[%s227] ss:$8 sm:$0x3]
    %s229 = scalar_lea.vmem [#allocation3], 4
    %230 = vst.msk [vmem:[%s229] ss:$2 sm:$0x3] %vm225, %v228
    %s231 = scalar_lea.vmem [#allocation2], 2
    %v232 = vld [vmem:[%s231] ss:$8 sm:$0x3]
    %s233 = scalar_lea.vmem [#allocation3], 8
    %234 = vst.msk [vmem:[%s233] ss:$2 sm:$0x3] %vm225, %v232
    %s235 = scalar_lea.vmem [#allocation2], 3
    %v236 = vld [vmem:[%s235] ss:$8 sm:$0x3]
    %s237 = scalar_lea.vmem [#allocation3], 12
    %238 = vst.msk [vmem:[%s237] ss:$2 sm:$0x3] %vm225, %v236
    %s239 = scalar_lea.vmem [#allocation2], 4
    %v240 = vld [vmem:[%s239] ss:$8 sm:$0x3]
    %s241 = scalar_lea.vmem [#allocation3], 16
    %242 = vst.msk [vmem:[%s241] ss:$2 sm:$0x3] %vm225, %v240
    %s243 = scalar_lea.vmem [#allocation2], 16
    %v244 = vld [vmem:[%s243] ss:$8 sm:$0x3]
    %s245 = scalar_lea.vmem [#allocation3], 1
    %246 = vst.msk [vmem:[%s245] ss:$2 sm:$0x3] %vm225, %v244
    %s247 = scalar_lea.vmem [#allocation2], 17
    %v248 = vld [vmem:[%s247] ss:$8 sm:$0x3]
    %s249 = scalar_lea.vmem [#allocation3], 5
    %250 = vst.msk [vmem:[%s249] ss:$2 sm:$0x3] %vm225, %v248
    %s251 = scalar_lea.vmem [#allocation2], 18
    %v252 = vld [vmem:[%s251] ss:$8 sm:$0x3]
    %s253 = scalar_lea.vmem [#allocation3], 9
    %254 = vst.msk [vmem:[%s253] ss:$2 sm:$0x3] %vm225, %v252
    %s255 = scalar_lea.vmem [#allocation2], 19
    %v256 = vld [vmem:[%s255] ss:$8 sm:$0x3]
    %s257 = scalar_lea.vmem [#allocation3], 13
    %258 = vst.msk [vmem:[%s257] ss:$2 sm:$0x3] %vm225, %v256
    %s259 = scalar_lea.vmem [#allocation2], 20
    %v260 = vld [vmem:[%s259] ss:$8 sm:$0x3]
    %s261 = scalar_lea.vmem [#allocation3], 17
    %262 = vst.msk [vmem:[%s261] ss:$2 sm:$0x3] %vm225, %v260
    %v263 = vld [vmem:[#allocation3] sm:$0xff]
    %v264 = vld [vmem:[#allocation3 + $0x8] sm:$0xff]
    %v265 = vld [vmem:[#allocation3 + $0x10] sm:$0xf]
    %v269 = vcombine.high %v263, %v263
    %v271 = vunpack.c.l.s4 1983009808
    %v272 = vunpack.c.0.s8 %v271
    %v273 = vlaneseq
    %v274 = vshrl.u32 %v273, 7
    %v275 = vsub.s32 %v272, %v274
    %v276 = vrot.slane %v263, %v275
    %v278 = vunpack.c.l.s4 1983009808
    %v279 = vunpack.c.0.s8 %v278
    %v280 = vlaneseq
    %v281 = vshrl.u32 %v280, 7
    %v282 = vsub.s32 %v279, %v281
    %v283 = vrot.slane %v269, %v282
    %v284 = vcombine.high %v276, %v276
    %v285 = vcombine.high %v283, %v283
    %v286 = vcombine.high %v264, %v264
    %v288 = vunpack.c.l.s4 1983009808
    %v289 = vunpack.c.0.s8 %v288
    %v290 = vlaneseq
    %v291 = vshrl.u32 %v290, 7
    %v292 = vsub.s32 %v289, %v291
    %v293 = vrot.slane %v264, %v292
    %v295 = vunpack.c.l.s4 1983009808
    %v296 = vunpack.c.0.s8 %v295
    %v297 = vlaneseq
    %v298 = vshrl.u32 %v297, 7
    %v299 = vsub.s32 %v296, %v298
    %v300 = vrot.slane %v286, %v299
    %v301 = vcombine.high %v293, %v293
    %v302 = vcombine.high %v300, %v300
    %v304 = vunpack.c.l.s4 1983009808
    %v305 = vunpack.c.0.s8 %v304
    %v306 = vlaneseq
    %v307 = vshrl.u32 %v306, 7
    %v308 = vsub.s32 %v305, %v307
    %v309 = vrot.slane %v265, %v308
    %v310 = vcombine.high %v309, %v309
    %v321 = vpack.c.bf16 %v276, %v276
    %v322 = vpack.c.bf16 %v284, %v284
    %v323 = vpack.c.bf16 %v283, %v283
    %v324 = vpack.c.bf16 %v285, %v285
    %v325 = vpack.c.bf16 %v293, %v293
    %v326 = vpack.c.bf16 %v301, %v301
    %v327 = vpack.c.bf16 %v300, %v300
    %v328 = vpack.c.bf16 %v302, %v302
    %v329 = vpack.c.bf16 %v309, %v309
    %v330 = vpack.c.bf16 %v310, %v310
    %v331 = vld [vmem:[#allocation9] sm:$0xf]
    %v332 = vld [vmem:[#allocation9 + $0x4] sm:$0xf]
    %v333 = vld [vmem:[#allocation9 + $0x8] sm:$0xf]
    %v334 = vld [vmem:[#allocation9 + $0xc] sm:$0xf]
    %v335 = vld [vmem:[#allocation9 + $0x10] sm:$0xf]
    %v336 = vld [vmem:[#allocation9 + $0x14] sm:$0xf]
    %v337 = vld [vmem:[#allocation9 + $0x18] sm:$0xf]
    %v338 = vld [vmem:[#allocation9 + $0x1c] sm:$0xf]
    %v339 = vld [vmem:[#allocation9 + $0x20] sm:$0xf]
    %v340 = vld [vmem:[#allocation9 + $0x24] sm:$0xf]
    %v341 = vld [vmem:[#allocation9 + $0x28] sm:$0xf]
    %v342 = vld [vmem:[#allocation9 + $0x2c] sm:$0xf]
    %v343 = vld [vmem:[#allocation9 + $0x30] sm:$0xf]
    %v344 = vld [vmem:[#allocation9 + $0x34] sm:$0xf]
    %v345 = vld [vmem:[#allocation9 + $0x38] sm:$0xf]
    %v346 = vld [vmem:[#allocation9 + $0x3c] sm:$0xf]
    %v347 = vld [vmem:[#allocation9 + $0x40] sm:$0xf]
    %v348 = vld [vmem:[#allocation9 + $0x44] sm:$0xf]
    %v349 = vld [vmem:[#allocation9 + $0x48] sm:$0xf]
    %v350 = vld [vmem:[#allocation9 + $0x4c] sm:$0xf]
    %v351 = vld [vmem:[#allocation9 + $0x50] sm:$0xf]
    %v352 = vld [vmem:[#allocation9 + $0x54] sm:$0xf]
    %v353 = vld [vmem:[#allocation9 + $0x58] sm:$0xf]
    %v354 = vld [vmem:[#allocation9 + $0x5c] sm:$0xf]
    %v355 = vld [vmem:[#allocation9 + $0x60] sm:$0xf]
    %v356 = vld [vmem:[#allocation9 + $0x64] sm:$0xf]
    %v357 = vld [vmem:[#allocation9 + $0x68] sm:$0xf]
    %v358 = vld [vmem:[#allocation9 + $0x6c] sm:$0xf]
    %v359 = vld [vmem:[#allocation9 + $0x70] sm:$0xf]
    %v360 = vld [vmem:[#allocation9 + $0x74] sm:$0xf]
    %v361 = vld [vmem:[#allocation9 + $0x78] sm:$0xf]
    %v362 = vld [vmem:[#allocation9 + $0x7c] sm:$0xf]
    %v363 = vld [vmem:[#allocation9 + $0x80] sm:$0xf]
    %v364 = vld [vmem:[#allocation9 + $0x84] sm:$0xf]
    %v365 = vld [vmem:[#allocation9 + $0x88] sm:$0xf]
    %v366 = vld [vmem:[#allocation9 + $0x8c] sm:$0xf]
    %v367 = vld [vmem:[#allocation9 + $0x90] sm:$0xf]
    %v368 = vld [vmem:[#allocation9 + $0x94] sm:$0xf]
    %v369 = vld [vmem:[#allocation9 + $0x98] sm:$0xf]
    %v370 = vld [vmem:[#allocation9 + $0x9c] sm:$0xf]
    %v371 = vld [vmem:[#allocation9 + $0xa0] sm:$0xf]
    %v372 = vld [vmem:[#allocation9 + $0xa4] sm:$0xf]
    %v373 = vld [vmem:[#allocation9 + $0xa8] sm:$0xf]
    %v374 = vld [vmem:[#allocation9 + $0xac] sm:$0xf]
    %v375 = vld [vmem:[#allocation9 + $0xb0] sm:$0xf]
    %v376 = vld [vmem:[#allocation9 + $0xb4] sm:$0xf]
    %v377 = vld [vmem:[#allocation9 + $0xb8] sm:$0xf]
    %v378 = vld [vmem:[#allocation9 + $0xbc] sm:$0xf]
    %v379 = vld [vmem:[#allocation9 + $0xc0] sm:$0xf]
    %v380 = vld [vmem:[#allocation9 + $0xc4] sm:$0xf]
    %v381 = vld [vmem:[#allocation9 + $0xc8] sm:$0xf]
    %v382 = vld [vmem:[#allocation9 + $0xcc] sm:$0xf]
    %v383 = vld [vmem:[#allocation9 + $0xd0] sm:$0xf]
    %v384 = vld [vmem:[#allocation9 + $0xd4] sm:$0xf]
    %v385 = vld [vmem:[#allocation9 + $0xd8] sm:$0xf]
    %v386 = vld [vmem:[#allocation9 + $0xdc] sm:$0xf]
    %v387 = vld [vmem:[#allocation9 + $0xe0] sm:$0xf]
    %v388 = vld [vmem:[#allocation9 + $0xe4] sm:$0xf]
    %v389 = vld [vmem:[#allocation9 + $0xe8] sm:$0xf]
    %v390 = vld [vmem:[#allocation9 + $0xec] sm:$0xf]
    %v391 = vld [vmem:[#allocation9 + $0xf0] sm:$0xf]
    %v392 = vld [vmem:[#allocation9 + $0xf4] sm:$0xf]
    %v393 = vld [vmem:[#allocation9 + $0xf8] sm:$0xf]
    %v394 = vld [vmem:[#allocation9 + $0xfc] sm:$0xf]
    %v395 = vld [vmem:[#allocation9 + $0x100] sm:$0xf]
    %v396 = vld [vmem:[#allocation9 + $0x104] sm:$0xf]
    %v397 = vld [vmem:[#allocation9 + $0x108] sm:$0xf]
    %v398 = vld [vmem:[#allocation9 + $0x10c] sm:$0xf]
    %v399 = vld [vmem:[#allocation9 + $0x110] sm:$0xf]
    %v400 = vld [vmem:[#allocation9 + $0x114] sm:$0xf]
    %v401 = vld [vmem:[#allocation9 + $0x118] sm:$0xf]
    %v402 = vld [vmem:[#allocation9 + $0x11c] sm:$0xf]
    %v403 = vld [vmem:[#allocation9 + $0x120] sm:$0xf]
    %v404 = vld [vmem:[#allocation9 + $0x124] sm:$0xf]
    %v405 = vld [vmem:[#allocation9 + $0x128] sm:$0xf]
    %v406 = vld [vmem:[#allocation9 + $0x12c] sm:$0xf]
    %v407 = vld [vmem:[#allocation9 + $0x130] sm:$0xf]
    %v408 = vld [vmem:[#allocation9 + $0x134] sm:$0xf]
    %v409 = vld [vmem:[#allocation9 + $0x138] sm:$0xf]
    %v410 = vld [vmem:[#allocation9 + $0x13c] sm:$0xf]
    %v411 = vld [vmem:[#allocation9 + $0x140] sm:$0xf]
    %v412 = vld [vmem:[#allocation9 + $0x144] sm:$0xf]
    %v413 = vld [vmem:[#allocation9 + $0x148] sm:$0xf]
    %v414 = vld [vmem:[#allocation9 + $0x14c] sm:$0xf]
    %v415 = vld [vmem:[#allocation9 + $0x150] sm:$0xf]
    %v416 = vld [vmem:[#allocation9 + $0x154] sm:$0xf]
    %v417 = vld [vmem:[#allocation9 + $0x158] sm:$0xf]
    %v418 = vld [vmem:[#allocation9 + $0x15c] sm:$0xf]
    %v419 = vld [vmem:[#allocation9 + $0x160] sm:$0xf]
    %v420 = vld [vmem:[#allocation9 + $0x164] sm:$0xf]
    %v421 = vld [vmem:[#allocation9 + $0x168] sm:$0xf]
    %v422 = vld [vmem:[#allocation9 + $0x16c] sm:$0xf]
    %v423 = vld [vmem:[#allocation9 + $0x170] sm:$0xf]
    %v424 = vld [vmem:[#allocation9 + $0x174] sm:$0xf]
    %v425 = vld [vmem:[#allocation9 + $0x178] sm:$0xf]
    %v426 = vld [vmem:[#allocation9 + $0x17c] sm:$0xf]
    %v427 = vld [vmem:[#allocation9 + $0x180] sm:$0xf]
    %v428 = vld [vmem:[#allocation9 + $0x184] sm:$0xf]
    %v429 = vld [vmem:[#allocation9 + $0x188] sm:$0xf]
    %v430 = vld [vmem:[#allocation9 + $0x18c] sm:$0xf]
    %v431 = vld [vmem:[#allocation9 + $0x190] sm:$0xf]
    %v432 = vld [vmem:[#allocation9 + $0x194] sm:$0xf]
    %v433 = vld [vmem:[#allocation9 + $0x198] sm:$0xf]
    %v434 = vld [vmem:[#allocation9 + $0x19c] sm:$0xf]
    %v435 = vld [vmem:[#allocation9 + $0x1a0] sm:$0xf]
    %v436 = vld [vmem:[#allocation9 + $0x1a4] sm:$0xf]
    %v437 = vld [vmem:[#allocation9 + $0x1a8] sm:$0xf]
    %v438 = vld [vmem:[#allocation9 + $0x1ac] sm:$0xf]
    %v439 = vld [vmem:[#allocation9 + $0x1b0] sm:$0xf]
    %v440 = vld [vmem:[#allocation9 + $0x1b4] sm:$0xf]
    %v441 = vld [vmem:[#allocation9 + $0x1b8] sm:$0xf]
    %v442 = vld [vmem:[#allocation9 + $0x1bc] sm:$0xf]
    %v443 = vld [vmem:[#allocation9 + $0x1c0] sm:$0xf]
    %v444 = vld [vmem:[#allocation9 + $0x1c4] sm:$0xf]
    %v445 = vld [vmem:[#allocation9 + $0x1c8] sm:$0xf]
    %v446 = vld [vmem:[#allocation9 + $0x1cc] sm:$0xf]
    %v447 = vld [vmem:[#allocation9 + $0x1d0] sm:$0xf]
    %v448 = vld [vmem:[#allocation9 + $0x1d4] sm:$0xf]
    %v449 = vld [vmem:[#allocation9 + $0x1d8] sm:$0xf]
    %v450 = vld [vmem:[#allocation9 + $0x1dc] sm:$0xf]
    %v451 = vld [vmem:[#allocation9 + $0x1e0] sm:$0xf]
    %v452 = vld [vmem:[#allocation9 + $0x1e4] sm:$0xf]
    %v453 = vld [vmem:[#allocation9 + $0x1e8] sm:$0xf]
    %v454 = vld [vmem:[#allocation9 + $0x1ec] sm:$0xf]
    %v455 = vld [vmem:[#allocation9 + $0x1f0] sm:$0xf]
    %v456 = vld [vmem:[#allocation9 + $0x1f4] sm:$0xf]
    %v457 = vld [vmem:[#allocation9 + $0x1f8] sm:$0xf]
    %v458 = vld [vmem:[#allocation9 + $0x1fc] sm:$0xf]
    %v459 = vld [vmem:[#allocation9 + $0x200] sm:$0xf]
    %v460 = vld [vmem:[#allocation9 + $0x204] sm:$0xf]
    %v461 = vld [vmem:[#allocation9 + $0x208] sm:$0xf]
    %v462 = vld [vmem:[#allocation9 + $0x20c] sm:$0xf]
    %v463 = vld [vmem:[#allocation9 + $0x210] sm:$0xf]
    %v464 = vld [vmem:[#allocation9 + $0x214] sm:$0xf]
    %v465 = vld [vmem:[#allocation9 + $0x218] sm:$0xf]
    %v466 = vld [vmem:[#allocation9 + $0x21c] sm:$0xf]
    %v467 = vld [vmem:[#allocation9 + $0x220] sm:$0xf]
    %v468 = vld [vmem:[#allocation9 + $0x224] sm:$0xf]
    %v469 = vld [vmem:[#allocation9 + $0x228] sm:$0xf]
    %v470 = vld [vmem:[#allocation9 + $0x22c] sm:$0xf]
    %v471 = vld [vmem:[#allocation9 + $0x230] sm:$0xf]
    %v472 = vld [vmem:[#allocation9 + $0x234] sm:$0xf]
    %v473 = vld [vmem:[#allocation9 + $0x238] sm:$0xf]
    %v474 = vld [vmem:[#allocation9 + $0x23c] sm:$0xf]
    %v475 = vld [vmem:[#allocation9 + $0x240] sm:$0xf]
    %v476 = vld [vmem:[#allocation9 + $0x244] sm:$0xf]
    %v477 = vld [vmem:[#allocation9 + $0x248] sm:$0xf]
    %v478 = vld [vmem:[#allocation9 + $0x24c] sm:$0xf]
    %v479 = vld [vmem:[#allocation9 + $0x250] sm:$0xf]
    %v480 = vld [vmem:[#allocation9 + $0x254] sm:$0xf]
    %v481 = vld [vmem:[#allocation9 + $0x258] sm:$0xf]
    %v482 = vld [vmem:[#allocation9 + $0x25c] sm:$0xf]
    %v483 = vld [vmem:[#allocation9 + $0x260] sm:$0xf]
    %v484 = vld [vmem:[#allocation9 + $0x264] sm:$0xf]
    %v485 = vld [vmem:[#allocation9 + $0x268] sm:$0xf]
    %v486 = vld [vmem:[#allocation9 + $0x26c] sm:$0xf]
    %v487 = vld [vmem:[#allocation9 + $0x270] sm:$0xf]
    %v488 = vld [vmem:[#allocation9 + $0x274] sm:$0xf]
    %v489 = vld [vmem:[#allocation9 + $0x278] sm:$0xf]
    %v490 = vld [vmem:[#allocation9 + $0x27c] sm:$0xf]
    %v491 = vld [vmem:[%s3] sm:$0x1]
    %v493 = vlaneseq
    %v494 = vshrl.u32 %v493, 7
    %v495 = vsub.s32 0, %v494
    %v496 = vrot.slane %v491, %v495
    %v658 = vunpack.c.l.b16 %v331
    %v659 = vunpack.c.l.b16 %v332
    %v660 = vunpack.c.l.b16 %v333
    %v661 = vunpack.c.l.b16 %v334
    %v662 = vunpack.c.l.b16 %v335
    %v663 = vunpack.c.l.b16 %v336
    %v664 = vunpack.c.l.b16 %v337
    %v665 = vunpack.c.l.b16 %v338
    %v666 = vunpack.c.l.b16 %v339
    %v667 = vunpack.c.l.b16 %v340
    %v668 = vunpack.c.l.b16 %v341
    %v669 = vunpack.c.l.b16 %v342
    %v670 = vunpack.c.l.b16 %v343
    %v671 = vunpack.c.l.b16 %v344
    %v672 = vunpack.c.l.b16 %v345
    %v673 = vunpack.c.l.b16 %v346
    %v674 = vunpack.c.l.b16 %v347
    %v675 = vunpack.c.l.b16 %v348
    %v676 = vunpack.c.l.b16 %v349
    %v677 = vunpack.c.l.b16 %v350
    %v678 = vunpack.c.l.b16 %v351
    %v679 = vunpack.c.l.b16 %v352
    %v680 = vunpack.c.l.b16 %v353
    %v681 = vunpack.c.l.b16 %v354
    %v682 = vunpack.c.l.b16 %v355
    %v683 = vunpack.c.l.b16 %v356
    %v684 = vunpack.c.l.b16 %v357
    %v685 = vunpack.c.l.b16 %v358
    %v686 = vunpack.c.l.b16 %v359
    %v687 = vunpack.c.l.b16 %v360
    %v688 = vunpack.c.l.b16 %v361
    %v689 = vunpack.c.l.b16 %v362
    %v690 = vunpack.c.l.b16 %v363
    %v691 = vunpack.c.l.b16 %v364
    %v692 = vunpack.c.l.b16 %v365
    %v693 = vunpack.c.l.b16 %v366
    %v694 = vunpack.c.l.b16 %v367
    %v695 = vunpack.c.l.b16 %v368
    %v696 = vunpack.c.l.b16 %v369
    %v697 = vunpack.c.l.b16 %v370
    %v698 = vunpack.c.l.b16 %v371
    %v699 = vunpack.c.l.b16 %v372
    %v700 = vunpack.c.l.b16 %v373
    %v701 = vunpack.c.l.b16 %v374
    %v702 = vunpack.c.l.b16 %v375
    %v703 = vunpack.c.l.b16 %v376
    %v704 = vunpack.c.l.b16 %v377
    %v705 = vunpack.c.l.b16 %v378
    %v706 = vunpack.c.l.b16 %v379
    %v707 = vunpack.c.l.b16 %v380
    %v708 = vunpack.c.l.b16 %v381
    %v709 = vunpack.c.l.b16 %v382
    %v710 = vunpack.c.l.b16 %v383
    %v711 = vunpack.c.l.b16 %v384
    %v712 = vunpack.c.l.b16 %v385
    %v713 = vunpack.c.l.b16 %v386
    %v714 = vunpack.c.l.b16 %v387
    %v715 = vunpack.c.l.b16 %v388
    %v716 = vunpack.c.l.b16 %v389
    %v717 = vunpack.c.l.b16 %v390
    %v718 = vunpack.c.l.b16 %v391
    %v719 = vunpack.c.l.b16 %v392
    %v720 = vunpack.c.l.b16 %v393
    %v721 = vunpack.c.l.b16 %v394
    %v722 = vunpack.c.l.b16 %v395
    %v723 = vunpack.c.l.b16 %v396
    %v724 = vunpack.c.l.b16 %v397
    %v725 = vunpack.c.l.b16 %v398
    %v726 = vunpack.c.l.b16 %v399
    %v727 = vunpack.c.l.b16 %v400
    %v728 = vunpack.c.l.b16 %v401
    %v729 = vunpack.c.l.b16 %v402
    %v730 = vunpack.c.l.b16 %v403
    %v731 = vunpack.c.l.b16 %v404
    %v732 = vunpack.c.l.b16 %v405
    %v733 = vunpack.c.l.b16 %v406
    %v734 = vunpack.c.l.b16 %v407
    %v735 = vunpack.c.l.b16 %v408
    %v736 = vunpack.c.l.b16 %v409
    %v737 = vunpack.c.l.b16 %v410
    %v738 = vunpack.c.l.b16 %v411
    %v739 = vunpack.c.l.b16 %v412
    %v740 = vunpack.c.l.b16 %v413
    %v741 = vunpack.c.l.b16 %v414
    %v742 = vunpack.c.l.b16 %v415
    %v743 = vunpack.c.l.b16 %v416
    %v744 = vunpack.c.l.b16 %v417
    %v745 = vunpack.c.l.b16 %v418
    %v746 = vunpack.c.l.b16 %v419
    %v747 = vunpack.c.l.b16 %v420
    %v748 = vunpack.c.l.b16 %v421
    %v749 = vunpack.c.l.b16 %v422
    %v750 = vunpack.c.l.b16 %v423
    %v751 = vunpack.c.l.b16 %v424
    %v752 = vunpack.c.l.b16 %v425
    %v753 = vunpack.c.l.b16 %v426
    %v754 = vunpack.c.l.b16 %v427
    %v755 = vunpack.c.l.b16 %v428
    %v756 = vunpack.c.l.b16 %v429
    %v757 = vunpack.c.l.b16 %v430
    %v758 = vunpack.c.l.b16 %v431
    %v759 = vunpack.c.l.b16 %v432
    %v760 = vunpack.c.l.b16 %v433
    %v761 = vunpack.c.l.b16 %v434
    %v762 = vunpack.c.l.b16 %v435
    %v763 = vunpack.c.l.b16 %v436
    %v764 = vunpack.c.l.b16 %v437
    %v765 = vunpack.c.l.b16 %v438
    %v766 = vunpack.c.l.b16 %v439
    %v767 = vunpack.c.l.b16 %v440
    %v768 = vunpack.c.l.b16 %v441
    %v769 = vunpack.c.l.b16 %v442
    %v770 = vunpack.c.l.b16 %v443
    %v771 = vunpack.c.l.b16 %v444
    %v772 = vunpack.c.l.b16 %v445
    %v773 = vunpack.c.l.b16 %v446
    %v774 = vunpack.c.l.b16 %v447
    %v775 = vunpack.c.l.b16 %v448
    %v776 = vunpack.c.l.b16 %v449
    %v777 = vunpack.c.l.b16 %v450
    %v778 = vunpack.c.l.b16 %v451
    %v779 = vunpack.c.l.b16 %v452
    %v780 = vunpack.c.l.b16 %v453
    %v781 = vunpack.c.l.b16 %v454
    %v782 = vunpack.c.l.b16 %v455
    %v783 = vunpack.c.l.b16 %v456
    %v784 = vunpack.c.l.b16 %v457
    %v785 = vunpack.c.l.b16 %v458
    %v786 = vunpack.c.l.b16 %v459
    %v787 = vunpack.c.l.b16 %v460
    %v788 = vunpack.c.l.b16 %v461
    %v789 = vunpack.c.l.b16 %v462
    %v790 = vunpack.c.l.b16 %v463
    %v791 = vunpack.c.l.b16 %v464
    %v792 = vunpack.c.l.b16 %v465
    %v793 = vunpack.c.l.b16 %v466
    %v794 = vunpack.c.l.b16 %v467
    %v795 = vunpack.c.l.b16 %v468
    %v796 = vunpack.c.l.b16 %v469
    %v797 = vunpack.c.l.b16 %v470
    %v798 = vunpack.c.l.b16 %v471
    %v799 = vunpack.c.l.b16 %v472
    %v800 = vunpack.c.l.b16 %v473
    %v801 = vunpack.c.l.b16 %v474
    %v802 = vunpack.c.l.b16 %v475
    %v803 = vunpack.c.l.b16 %v476
    %v804 = vunpack.c.l.b16 %v477
    %v805 = vunpack.c.l.b16 %v478
    %v806 = vunpack.c.l.b16 %v479
    %v807 = vunpack.c.l.b16 %v480
    %v808 = vunpack.c.l.b16 %v481
    %v809 = vunpack.c.l.b16 %v482
    %v810 = vunpack.c.l.b16 %v483
    %v811 = vunpack.c.l.b16 %v484
    %v812 = vunpack.c.l.b16 %v485
    %v813 = vunpack.c.l.b16 %v486
    %v814 = vunpack.c.l.b16 %v487
    %v815 = vunpack.c.l.b16 %v488
    %v816 = vunpack.c.l.b16 %v489
    %v817 = vunpack.c.l.b16 %v490
    %v818 = vpack.c.b16 %v659, %v658
    %v819 = vpack.c.b16 %v661, %v660
    %v820 = vpack.c.b16 %v663, %v662
    %v821 = vpack.c.b16 %v665, %v664
    %v822 = vpack.c.b16 %v667, %v666
    %v823 = vpack.c.b16 %v669, %v668
    %v824 = vpack.c.b16 %v671, %v670
    %v825 = vpack.c.b16 %v673, %v672
    %v826 = vpack.c.b16 %v675, %v674
    %v827 = vpack.c.b16 %v677, %v676
    %v828 = vpack.c.b16 %v679, %v678
    %v829 = vpack.c.b16 %v681, %v680
    %v830 = vpack.c.b16 %v683, %v682
    %v831 = vpack.c.b16 %v685, %v684
    %v832 = vpack.c.b16 %v687, %v686
    %v833 = vpack.c.b16 %v689, %v688
    %v834 = vpack.c.b16 %v691, %v690
    %v835 = vpack.c.b16 %v693, %v692
    %v836 = vpack.c.b16 %v695, %v694
    %v837 = vpack.c.b16 %v697, %v696
    %v838 = vpack.c.b16 %v699, %v698
    %v839 = vpack.c.b16 %v701, %v700
    %v840 = vpack.c.b16 %v703, %v702
    %v841 = vpack.c.b16 %v705, %v704
    %v842 = vpack.c.b16 %v707, %v706
    %v843 = vpack.c.b16 %v709, %v708
    %v844 = vpack.c.b16 %v711, %v710
    %v845 = vpack.c.b16 %v713, %v712
    %v846 = vpack.c.b16 %v715, %v714
    %v847 = vpack.c.b16 %v717, %v716
    %v848 = vpack.c.b16 %v719, %v718
    %v849 = vpack.c.b16 %v721, %v720
    %v850 = vpack.c.b16 %v723, %v722
    %v851 = vpack.c.b16 %v725, %v724
    %v852 = vpack.c.b16 %v727, %v726
    %v853 = vpack.c.b16 %v729, %v728
    %v854 = vpack.c.b16 %v731, %v730
    %v855 = vpack.c.b16 %v733, %v732
    %v856 = vpack.c.b16 %v735, %v734
    %v857 = vpack.c.b16 %v737, %v736
    %v858 = vpack.c.b16 %v739, %v738
    %v859 = vpack.c.b16 %v741, %v740
    %v860 = vpack.c.b16 %v743, %v742
    %v861 = vpack.c.b16 %v745, %v744
    %v862 = vpack.c.b16 %v747, %v746
    %v863 = vpack.c.b16 %v749, %v748
    %v864 = vpack.c.b16 %v751, %v750
    %v865 = vpack.c.b16 %v753, %v752
    %v866 = vpack.c.b16 %v755, %v754
    %v867 = vpack.c.b16 %v757, %v756
    %v868 = vpack.c.b16 %v759, %v758
    %v869 = vpack.c.b16 %v761, %v760
    %v870 = vpack.c.b16 %v763, %v762
    %v871 = vpack.c.b16 %v765, %v764
    %v872 = vpack.c.b16 %v767, %v766
    %v873 = vpack.c.b16 %v769, %v768
    %v874 = vpack.c.b16 %v771, %v770
    %v875 = vpack.c.b16 %v773, %v772
    %v876 = vpack.c.b16 %v775, %v774
    %v877 = vpack.c.b16 %v777, %v776
    %v878 = vpack.c.b16 %v779, %v778
    %v879 = vpack.c.b16 %v781, %v780
    %v880 = vpack.c.b16 %v783, %v782
    %v881 = vpack.c.b16 %v785, %v784
    %v882 = vpack.c.b16 %v787, %v786
    %v883 = vpack.c.b16 %v789, %v788
    %v884 = vpack.c.b16 %v791, %v790
    %v885 = vpack.c.b16 %v793, %v792
    %v886 = vpack.c.b16 %v795, %v794
    %v887 = vpack.c.b16 %v797, %v796
    %v888 = vpack.c.b16 %v799, %v798
    %v889 = vpack.c.b16 %v801, %v800
    %v890 = vpack.c.b16 %v803, %v802
    %v891 = vpack.c.b16 %v805, %v804
    %v892 = vpack.c.b16 %v807, %v806
    %v893 = vpack.c.b16 %v809, %v808
    %v894 = vpack.c.b16 %v811, %v810
    %v895 = vpack.c.b16 %v813, %v812
    %v896 = vpack.c.b16 %v815, %v814
    %v897 = vpack.c.b16 %v817, %v816
    %978 = vmatprep.subr.bf16.mxu0 0
    %979 = vmatpush1.bf16.msra.mxu0 %v818
    %980 = vmatprep.subr.bf16.mxu0 0
    %981 = vmatpush1.bf16.msra.mxu0 %v819
    %982 = vmatprep.subr.bf16.mxu0 0
    %983 = vmatpush1.bf16.msra.mxu0 %v820
    %984 = vmatprep.subr.bf16.mxu0 0
    %985 = vmatpush1.bf16.msra.mxu0 %v821
    %986 = vmatprep.subr.bf16.mxu0 0
    %987 = vmatpush1.bf16.msra.mxu0 %v822
    %988 = vmatprep.subr.bf16.mxu0 0
    %989 = vmatpush1.bf16.msra.mxu0 %v823
    %990 = vmatprep.subr.bf16.mxu0 0
    %991 = vmatpush1.bf16.msra.mxu0 %v824
    %992 = vmatprep.subr.bf16.mxu0 0
    %993 = vmatpush1.bf16.msra.mxu0 %v825
    %994 = vmatprep.subr.bf16.mxu0 0
    %995 = vmatpush1.bf16.msra.mxu0 %v826
    %996 = vmatprep.subr.bf16.mxu0 0
    %997 = vmatpush1.bf16.msra.mxu0 %v827
    %998 = vmatprep.subr.bf16.mxu0 0
    %999 = vmatpush1.bf16.msra.mxu0 %v828
    %1000 = vmatprep.subr.bf16.mxu0 0
    %1001 = vmatpush1.bf16.msra.mxu0 %v829
    %1002 = vmatprep.subr.bf16.mxu0 0
    %1003 = vmatpush1.bf16.msra.mxu0 %v830
    %1004 = vmatprep.subr.bf16.mxu0 0
    %1005 = vmatpush1.bf16.msra.mxu0 %v831
    %1006 = vmatprep.subr.bf16.mxu0 0
    %1007 = vmatpush1.bf16.msra.mxu0 %v832
    %1008 = vmatprep.subr.bf16.mxu0 0
    %1009 = vmatpush1.bf16.msra.mxu0 %v833
    %1010 = vmatprep.mubr.bf16.mxu0 %v322
    %1011 = vmatmul.mubr.bf16.gmra.mrb[0].mxu0 %v321
    %v1012 = vpop.f32.mrb[0].mxu0
    %v1013 = vadd.f32 %v496, %v1012
    %v1014 = vpop.f32.mrb[0].mxu0
    %v1015 = vpop.f32.mrb[0].mxu0
    %v1016 = vpop.f32.mrb[0].mxu0
    %1017 = vdwg.mxu0
    %1018 = vmatprep.subr.bf16.mxu0 0
    %1019 = vmatpush1.bf16.msra.mxu0 %v834
    %1020 = vmatprep.subr.bf16.mxu0 0
    %1021 = vmatpush1.bf16.msra.mxu0 %v835
    %1022 = vmatprep.subr.bf16.mxu0 0
    %1023 = vmatpush1.bf16.msra.mxu0 %v836
    %1024 = vmatprep.subr.bf16.mxu0 0
    %1025 = vmatpush1.bf16.msra.mxu0 %v837
    %1026 = vmatprep.subr.bf16.mxu0 0
    %1027 = vmatpush1.bf16.msra.mxu0 %v838
    %1028 = vmatprep.subr.bf16.mxu0 0
    %1029 = vmatpush1.bf16.msra.mxu0 %v839
    %1030 = vmatprep.subr.bf16.mxu0 0
    %1031 = vmatpush1.bf16.msra.mxu0 %v840
    %1032 = vmatprep.subr.bf16.mxu0 0
    %1033 = vmatpush1.bf16.msra.mxu0 %v841
    %1034 = vmatprep.subr.bf16.mxu0 0
    %1035 = vmatpush1.bf16.msra.mxu0 %v842
    %1036 = vmatprep.subr.bf16.mxu0 0
    %1037 = vmatpush1.bf16.msra.mxu0 %v843
    %1038 = vmatprep.subr.bf16.mxu0 0
    %1039 = vmatpush1.bf16.msra.mxu0 %v844
    %1040 = vmatprep.subr.bf16.mxu0 0
    %1041 = vmatpush1.bf16.msra.mxu0 %v845
    %1042 = vmatprep.subr.bf16.mxu0 0
    %1043 = vmatpush1.bf16.msra.mxu0 %v846
    %1044 = vmatprep.subr.bf16.mxu0 0
    %1045 = vmatpush1.bf16.msra.mxu0 %v847
    %1046 = vmatprep.subr.bf16.mxu0 0
    %1047 = vmatpush1.bf16.msra.mxu0 %v848
    %1048 = vmatprep.subr.bf16.mxu0 0
    %1049 = vmatpush1.bf16.msra.mxu0 %v849
    %1050 = vmatprep.mubr.bf16.mxu0 %v324
    %1051 = vmatmul.mubr.bf16.gmra.mrb[0].mxu0 %v323
    %v1052 = vpop.f32.mrb[0].mxu0
    %v1053 = vadd.f32 %v1013, %v1052
    %v1054 = vpop.f32.mrb[0].mxu0
    %v1055 = vpop.f32.mrb[0].mxu0
    %v1056 = vpop.f32.mrb[0].mxu0
    %1057 = vdwg.mxu0
    %1058 = vmatprep.subr.bf16.mxu0 0
    %1059 = vmatpush1.bf16.msra.mxu0 %v850
    %1060 = vmatprep.subr.bf16.mxu0 0
    %1061 = vmatpush1.bf16.msra.mxu0 %v851
    %1062 = vmatprep.subr.bf16.mxu0 0
    %1063 = vmatpush1.bf16.msra.mxu0 %v852
    %1064 = vmatprep.subr.bf16.mxu0 0
    %1065 = vmatpush1.bf16.msra.mxu0 %v853
    %1066 = vmatprep.subr.bf16.mxu0 0
    %1067 = vmatpush1.bf16.msra.mxu0 %v854
    %1068 = vmatprep.subr.bf16.mxu0 0
    %1069 = vmatpush1.bf16.msra.mxu0 %v855
    %1070 = vmatprep.subr.bf16.mxu0 0
    %1071 = vmatpush1.bf16.msra.mxu0 %v856
    %1072 = vmatprep.subr.bf16.mxu0 0
    %1073 = vmatpush1.bf16.msra.mxu0 %v857
    %1074 = vmatprep.subr.bf16.mxu0 0
    %1075 = vmatpush1.bf16.msra.mxu0 %v858
    %1076 = vmatprep.subr.bf16.mxu0 0
    %1077 = vmatpush1.bf16.msra.mxu0 %v859
    %1078 = vmatprep.subr.bf16.mxu0 0
    %1079 = vmatpush1.bf16.msra.mxu0 %v860
    %1080 = vmatprep.subr.bf16.mxu0 0
    %1081 = vmatpush1.bf16.msra.mxu0 %v861
    %1082 = vmatprep.subr.bf16.mxu0 0
    %1083 = vmatpush1.bf16.msra.mxu0 %v862
    %1084 = vmatprep.subr.bf16.mxu0 0
    %1085 = vmatpush1.bf16.msra.mxu0 %v863
    %1086 = vmatprep.subr.bf16.mxu0 0
    %1087 = vmatpush1.bf16.msra.mxu0 %v864
    %1088 = vmatprep.subr.bf16.mxu0 0
    %1089 = vmatpush1.bf16.msra.mxu0 %v865
    %1090 = vmatprep.mubr.bf16.mxu0 %v326
    %1091 = vmatmul.mubr.bf16.gmra.mrb[0].mxu0 %v325
    %v1092 = vpop.f32.mrb[0].mxu0
    %v1093 = vadd.f32 %v1053, %v1092
    %v1094 = vpop.f32.mrb[0].mxu0
    %v1095 = vpop.f32.mrb[0].mxu0
    %v1096 = vpop.f32.mrb[0].mxu0
    %1097 = vdwg.mxu0
    %1098 = vmatprep.subr.bf16.mxu0 0
    %1099 = vmatpush1.bf16.msra.mxu0 %v866
    %1100 = vmatprep.subr.bf16.mxu0 0
    %1101 = vmatpush1.bf16.msra.mxu0 %v867
    %1102 = vmatprep.subr.bf16.mxu0 0
    %1103 = vmatpush1.bf16.msra.mxu0 %v868
    %1104 = vmatprep.subr.bf16.mxu0 0
    %1105 = vmatpush1.bf16.msra.mxu0 %v869
    %1106 = vmatprep.subr.bf16.mxu0 0
    %1107 = vmatpush1.bf16.msra.mxu0 %v870
    %1108 = vmatprep.subr.bf16.mxu0 0
    %1109 = vmatpush1.bf16.msra.mxu0 %v871
    %1110 = vmatprep.subr.bf16.mxu0 0
    %1111 = vmatpush1.bf16.msra.mxu0 %v872
    %1112 = vmatprep.subr.bf16.mxu0 0
    %1113 = vmatpush1.bf16.msra.mxu0 %v873
    %1114 = vmatprep.subr.bf16.mxu0 0
    %1115 = vmatpush1.bf16.msra.mxu0 %v874
    %1116 = vmatprep.subr.bf16.mxu0 0
    %1117 = vmatpush1.bf16.msra.mxu0 %v875
    %1118 = vmatprep.subr.bf16.mxu0 0
    %1119 = vmatpush1.bf16.msra.mxu0 %v876
    %1120 = vmatprep.subr.bf16.mxu0 0
    %1121 = vmatpush1.bf16.msra.mxu0 %v877
    %1122 = vmatprep.subr.bf16.mxu0 0
    %1123 = vmatpush1.bf16.msra.mxu0 %v878
    %1124 = vmatprep.subr.bf16.mxu0 0
    %1125 = vmatpush1.bf16.msra.mxu0 %v879
    %1126 = vmatprep.subr.bf16.mxu0 0
    %1127 = vmatpush1.bf16.msra.mxu0 %v880
    %1128 = vmatprep.subr.bf16.mxu0 0
    %1129 = vmatpush1.bf16.msra.mxu0 %v881
    %1130 = vmatprep.mubr.bf16.mxu0 %v328
    %1131 = vmatmul.mubr.bf16.gmra.mrb[0].mxu0 %v327
    %v1132 = vpop.f32.mrb[0].mxu0
    %v1133 = vadd.f32 %v1093, %v1132
    %v1134 = vpop.f32.mrb[0].mxu0
    %v1135 = vpop.f32.mrb[0].mxu0
    %v1136 = vpop.f32.mrb[0].mxu0
    %1137 = vdwg.mxu0
    %1138 = vmatprep.subr.bf16.mxu0 0
    %1139 = vmatpush1.bf16.msra.mxu0 %v882
    %1140 = vmatprep.subr.bf16.mxu0 0
    %1141 = vmatpush1.bf16.msra.mxu0 %v883
    %1142 = vmatprep.subr.bf16.mxu0 0
    %1143 = vmatpush1.bf16.msra.mxu0 %v884
    %1144 = vmatprep.subr.bf16.mxu0 0
    %1145 = vmatpush1.bf16.msra.mxu0 %v885
    %1146 = vmatprep.subr.bf16.mxu0 0
    %1147 = vmatpush1.bf16.msra.mxu0 %v886
    %1148 = vmatprep.subr.bf16.mxu0 0
    %1149 = vmatpush1.bf16.msra.mxu0 %v887
    %1150 = vmatprep.subr.bf16.mxu0 0
    %1151 = vmatpush1.bf16.msra.mxu0 %v888
    %1152 = vmatprep.subr.bf16.mxu0 0
    %1153 = vmatpush1.bf16.msra.mxu0 %v889
    %1154 = vmatprep.subr.bf16.mxu0 0
    %1155 = vmatpush1.bf16.msra.mxu0 %v890
    %1156 = vmatprep.subr.bf16.mxu0 0
    %1157 = vmatpush1.bf16.msra.mxu0 %v891
    %1158 = vmatprep.subr.bf16.mxu0 0
    %1159 = vmatpush1.bf16.msra.mxu0 %v892
    %1160 = vmatprep.subr.bf16.mxu0 0
    %1161 = vmatpush1.bf16.msra.mxu0 %v893
    %1162 = vmatprep.subr.bf16.mxu0 0
    %1163 = vmatpush1.bf16.msra.mxu0 %v894
    %1164 = vmatprep.subr.bf16.mxu0 0
    %1165 = vmatpush1.bf16.msra.mxu0 %v895
    %1166 = vmatprep.subr.bf16.mxu0 0
    %1167 = vmatpush1.bf16.msra.mxu0 %v896
    %1168 = vmatprep.subr.bf16.mxu0 0
    %1169 = vmatpush1.bf16.msra.mxu0 %v897
    %1170 = vmatprep.mubr.bf16.mxu0 %v330
    %1171 = vmatmul.mubr.bf16.gmra.mrb[0].mxu0 %v329
    %v1172 = vpop.f32.mrb[0].mxu0
    %v1173 = vadd.f32 %v1133, %v1172
    %v1174 = vpop.f32.mrb[0].mxu0
    %v1175 = vpop.f32.mrb[0].mxu0
    %v1176 = vpop.f32.mrb[0].mxu0
    %1177 = vdwg.mxu0
    %v1178 = vmax.f32 %v1173, 0.0
    %v1179 = vpack.c.bf16 %v1178, %v1178
    %v1180 = vld [vmem:[#allocation10] sm:$0xf]
    %v1181 = vld [vmem:[#allocation10 + $0x4] sm:$0xf]
    %v1182 = vld [vmem:[#allocation10 + $0x8] sm:$0xf]
    %v1183 = vld [vmem:[#allocation10 + $0xc] sm:$0xf]
    %v1184 = vld [vmem:[#allocation10 + $0x10] sm:$0xf]
    %v1185 = vld [vmem:[#allocation10 + $0x14] sm:$0xf]
    %v1186 = vld [vmem:[#allocation10 + $0x18] sm:$0xf]
    %v1187 = vld [vmem:[#allocation10 + $0x1c] sm:$0xf]
    %v1188 = vld [vmem:[#allocation10 + $0x20] sm:$0xf]
    %v1189 = vld [vmem:[#allocation10 + $0x24] sm:$0xf]
    %v1190 = vld [vmem:[#allocation10 + $0x28] sm:$0xf]
    %v1191 = vld [vmem:[#allocation10 + $0x2c] sm:$0xf]
    %v1192 = vld [vmem:[#allocation10 + $0x30] sm:$0xf]
    %v1193 = vld [vmem:[#allocation10 + $0x34] sm:$0xf]
    %v1194 = vld [vmem:[#allocation10 + $0x38] sm:$0xf]
    %v1195 = vld [vmem:[#allocation10 + $0x3c] sm:$0xf]
    %v1196 = vld [vmem:[%s5] sm:$0x1]
    %v1198 = vlaneseq
    %v1199 = vshrl.u32 %v1198, 7
    %v1200 = vsub.s32 0, %v1199
    %v1201 = vrot.slane %v1196, %v1200
    %v1219 = vunpack.c.l.b16 %v1180
    %v1220 = vunpack.c.l.b16 %v1181
    %v1221 = vunpack.c.l.b16 %v1182
    %v1222 = vunpack.c.l.b16 %v1183
    %v1223 = vunpack.c.l.b16 %v1184
    %v1224 = vunpack.c.l.b16 %v1185
    %v1225 = vunpack.c.l.b16 %v1186
    %v1226 = vunpack.c.l.b16 %v1187
    %v1227 = vunpack.c.l.b16 %v1188
    %v1228 = vunpack.c.l.b16 %v1189
    %v1229 = vunpack.c.l.b16 %v1190
    %v1230 = vunpack.c.l.b16 %v1191
    %v1231 = vunpack.c.l.b16 %v1192
    %v1232 = vunpack.c.l.b16 %v1193
    %v1233 = vunpack.c.l.b16 %v1194
    %v1234 = vunpack.c.l.b16 %v1195
    %v1235 = vpack.c.b16 %v1220, %v1219
    %v1236 = vpack.c.b16 %v1222, %v1221
    %v1237 = vpack.c.b16 %v1224, %v1223
    %v1238 = vpack.c.b16 %v1226, %v1225
    %v1239 = vpack.c.b16 %v1228, %v1227
    %v1240 = vpack.c.b16 %v1230, %v1229
    %v1241 = vpack.c.b16 %v1232, %v1231
    %v1242 = vpack.c.b16 %v1234, %v1233
    %1251 = vmatprep.subr.bf16.mxu0 0
    %1252 = vmatpush1.bf16.msra.mxu0 %v1235
    %1253 = vmatprep.subr.bf16.mxu0 0
    %1254 = vmatpush1.bf16.msra.mxu0 %v1236
    %1255 = vmatprep.subr.bf16.mxu0 0
    %1256 = vmatpush1.bf16.msra.mxu0 %v1237
    %1257 = vmatprep.subr.bf16.mxu0 0
    %1258 = vmatpush1.bf16.msra.mxu0 %v1238
    %1259 = vmatprep.subr.bf16.mxu0 0
    %1260 = vmatpush1.bf16.msra.mxu0 %v1239
    %1261 = vmatprep.subr.bf16.mxu0 0
    %1262 = vmatpush1.bf16.msra.mxu0 %v1240
    %1263 = vmatprep.subr.bf16.mxu0 0
    %1264 = vmatpush1.bf16.msra.mxu0 %v1241
    %1265 = vmatprep.subr.bf16.mxu0 0
    %1266 = vmatpush1.bf16.msra.mxu0 %v1242
    %1267 = vmatprep.subr.bf16.mxu0 0
    %1268 = vmatpush1.bf16.msra.mxu0 0
    %1269 = vmatprep.subr.bf16.mxu0 0
    %1270 = vmatpush1.bf16.msra.mxu0 0
    %1271 = vmatprep.subr.bf16.mxu0 0
    %1272 = vmatpush1.bf16.msra.mxu0 0
    %1273 = vmatprep.subr.bf16.mxu0 0
    %1274 = vmatpush1.bf16.msra.mxu0 0
    %1275 = vmatprep.subr.bf16.mxu0 0
    %1276 = vmatpush1.bf16.msra.mxu0 0
    %1277 = vmatprep.subr.bf16.mxu0 0
    %1278 = vmatpush1.bf16.msra.mxu0 0
    %1279 = vmatprep.subr.bf16.mxu0 0
    %1280 = vmatpush1.bf16.msra.mxu0 0
    %1281 = vmatprep.subr.bf16.mxu0 0
    %1282 = vmatpush1.bf16.msra.mxu0 0
    %1283 = vmatprep.mubr.bf16.mxu0 0
    %1284 = vmatmul.mubr.bf16.gmra.mrb[0].mxu0 %v1179
    %v1285 = vpop.f32.mrb[0].mxu0
    %v1286 = vadd.f32 %v1201, %v1285
    %v1287 = vpop.f32.mrb[0].mxu0
    %v1288 = vpop.f32.mrb[0].mxu0
    %v1289 = vpop.f32.mrb[0].mxu0
    %1290 = vdwg.mxu0
    %1291 = vst [vmem:[#allocation12] sm:$0x3] %v1286
    // Predicated region
    $region42: #{tpu_custom_call.1} parent=1 // pred_check
      _
    $region43: #{tpu_custom_call.1} parent=1 // pred_check_branch
      %1293 = sbr.rel (0) target = $region45
    $region44: #{tpu_custom_call.1} parent=1 // pred_region
      %s1295 = ssub.s32 32, 32
      %1296 = vsyncadd [#allocation6], %s1295
      %s1298 = sshll.u32 [#allocation12], 4
      %s1299 = int_to_ptr.vmem [resolvable:$true] %s1298
      %1301 = dma.vmem_to_hbm [thread:$0]  %s1299, 32, %s6, [#allocation6]
    $region45: #{tpu_custom_call.1} parent=1 // pred_fallthru
      _
    // Predicated region
    $region46: #{tpu_custom_call.1} parent=1 // pred_check
      _
    $region47: #{tpu_custom_call.1} parent=1 // pred_check_branch
      %1303 = sbr.rel (0) target = $region49
    $region48: #{tpu_custom_call.1} parent=1 // pred_region
      %1304 = dma.done [#allocation6], 32
    $region49: #{tpu_custom_call.1} parent=1 // pred_fallthru
      _
    %1305 = vsyncpa [#allocation5], 1
    %1306 = vsyncpa [#allocation8], 1
    %1307 = vsyncpa [#allocation11], 1
    %1308 = vsyncpa [#allocation6], 1

</llo_original>
